<compile_context>
chip_gen: v7x
topology: tpu7x:2x2x1
jax: 0.10.0
libtpu: 0.0.40
codegen_flags: <defaults>
</compile_context>

<pallas_src>
import functools

import jax
import jax.numpy as jnp
import numpy as np
from jax.experimental import pallas as pl
from jax.experimental.pallas import tpu as pltpu


def _round_up(x, m):
    return ((x + m - 1) // m) * m


def _pick_batch_tile(B):
    # One batch tile per TensorCore (megacore) when halves stay (8,·)-aligned.
    if B % 2 == 0 and (B // 2) % 8 == 0:
        return B // 2
    return B


def _pick_time_chunk(T, TB, Hp, max_chunk=32, chunk_bytes_budget=4 << 20):
    # One gx chunk (TB,Tt,4Hp) bf16 + one y chunk (TB,Tt,Hp) bf16, both
    # double-buffered -> keep well under the scoped VMEM budget (v7x: 64 MiB).
    per_t = TB * 5 * Hp * 2 * 2
    tt = max(8, (chunk_bytes_budget // max(per_t, 1)) // 8 * 8)
    tt = min(tt, max_chunk, _round_up(T, 8))
    return int(max(8, tt))


# ---------------------------------------------------------------------------
# Kernel 1: row-tiled Linear (+bias). Used for the batched LSTM input
# projection over all timesteps at once (bf16 operands, f32 accumulation).
# ---------------------------------------------------------------------------
def _linear_bias_kernel(x_ref, w_ref, b_ref, o_ref):
    o_ref[...] = (jnp.dot(x_ref[...], w_ref[...],
                          preferred_element_type=jnp.float32)
                  + b_ref[...]).astype(o_ref.dtype)


def linear_pallas(x_nk, w_t, b_row, out_dtype=jnp.float32):
    """x_nk: (N, K). w_t: (K, M) bf16 (pre-transposed). b_row: (1, M) f32.
    Returns (N, M) in out_dtype (bf16 for the LSTM gates)."""
    N, K = x_nk.shape
    M = w_t.shape[1]
    TN = 256 if N >= 256 else _round_up(N, 8)   # TODO(synk): 512 on v5e/v6e
    N_pad = _round_up(N, TN)
    x_p = x_nk.astype(jnp.bfloat16)
    if N_pad != N:
        x_p = jnp.pad(x_p, ((0, N_pad - N), (0, 0)))
    out = pl.pallas_call(
        _linear_bias_kernel,
        out_shape=jax.ShapeDtypeStruct((N_pad, M), out_dtype),
        grid_spec=pltpu.PrefetchScalarGridSpec(
            num_scalar_prefetch=0,
            grid=(N_pad // TN,),
            in_specs=[
                pl.BlockSpec((TN, K), lambda i: (i, 0)),
                pl.BlockSpec((K, M), lambda i: (0, 0)),    # weight VMEM-resident
                pl.BlockSpec((1, M), lambda i: (0, 0)),    # bias VMEM-resident
            ],
            out_specs=pl.BlockSpec((TN, M), lambda i: (i, 0)),
        ),
        compiler_params=pltpu.CompilerParams(
            dimension_semantics=("parallel",)),
    )(x_p, w_t, b_row)
    return out[:N] if N_pad != N else out


# ---------------------------------------------------------------------------
# Kernel 2: LSTM recurrence. Consumes precomputed input-projection gates
# (B, T, 4Hp) bf16; grid = (batch tiles [parallel], time chunks [arbitrary]).
# Packed-sequence semantics via masking: for t >= seq_len[b] the state is
# frozen and the emitted output is zero (== pad_packed_sequence zero padding),
# so the final (h, c) equal the state at each sequence's last valid step.
# Gate order inside the kernel is (i, f, o, g): one sigmoid over [:, :3Hp],
# one tanh over [:, 3Hp:].
# ---------------------------------------------------------------------------
def _lstm_rec_kernel(len_ref, gx_ref, whh_ref, y_ref, hn_ref, cn_ref,
                     h_sc, c_sc, *, Tt, Hp):
    t_idx = pl.program_id(1)

    @pl.when(t_idx == 0)
    def _():
        h_sc[...] = jnp.zeros_like(h_sc)
        c_sc[...] = jnp.zeros_like(c_sc)

    lengths = len_ref[...]                 # (TB, 1) int32
    whh = whh_ref[...]                     # (Hp, 4Hp) bf16, VMEM-resident
    t0 = t_idx * Tt

    h = h_sc[...]                          # f32 carries
    c = c_sc[...]
    # Statically unrolled time loop with per-step ref load + per-step store:
    # only (h, c) are live across iterations.
    for i in range(Tt):
        gates = gx_ref[:, i, :].astype(jnp.float32) + jnp.dot(
            h.astype(jnp.bfloat16), whh, preferred_element_type=jnp.float32)
        sio = jax.nn.sigmoid(gates[:, :3 * Hp])        # i, f, o
        i_g = sio[:, 0 * Hp:1 * Hp]
        f_g = sio[:, 1 * Hp:2 * Hp]
        o_g = sio[:, 2 * Hp:3 * Hp]
        g_g = jnp.tanh(gates[:, 3 * Hp:4 * Hp])        # g
        c_new = f_g * c + i_g * g_g
        h_new = o_g * jnp.tanh(c_new)
        mask = lengths > (t0 + i)                      # (TB, 1), broadcasts over Hp
        y_ref[:, i, :] = jnp.where(mask, h_new, 0.0).astype(y_ref.dtype)
        h = jnp.where(mask, h_new, h)
        c = jnp.where(mask, c_new, c)

    h_sc[...] = h
    c_sc[...] = c

    # Store the final state only once, on the last time chunk of this batch tile.
    @pl.when(t_idx == pl.num_programs(1) - 1)
    def _():
        hn_ref[...] = h
        cn_ref[...] = c


def lstm_layer_pallas(gates_btg, lengths_b1, w_hh_t, *, Tt, TB):
    """gates_btg: (B, T_pad, 4Hp) bf16 precomputed x-projection (bias fused).
    w_hh_t: (Hp, 4Hp) bf16. Returns y (B, T_pad, Hp) bf16 and (h_n, c_n) f32."""
    B, T_pad, G = gates_btg.shape
    Hp = G // 4
    kernel = functools.partial(_lstm_rec_kernel, Tt=Tt, Hp=Hp)
    y, h_n, c_n = pl.pallas_call(
        kernel,
        out_shape=(
            jax.ShapeDtypeStruct((B, T_pad, Hp), jnp.bfloat16),
            jax.ShapeDtypeStruct((B, Hp), jnp.float32),
            jax.ShapeDtypeStruct((B, Hp), jnp.float32),
        ),
        grid_spec=pltpu.PrefetchScalarGridSpec(
            num_scalar_prefetch=0,
            grid=(B // TB, T_pad // Tt),
            in_specs=[
                pl.BlockSpec((TB, 1), lambda b, t: (b, 0)),                # lengths
                pl.BlockSpec((TB, Tt, 4 * Hp), lambda b, t: (b, t, 0)),    # gate chunk
                pl.BlockSpec((Hp, 4 * Hp), lambda b, t: (0, 0)),           # W_hh^T resident
            ],
            out_specs=[
                pl.BlockSpec((TB, Tt, Hp), lambda b, t: (b, t, 0)),        # y chunk
                pl.BlockSpec((TB, Hp), lambda b, t: (b, 0)),               # h_n
                pl.BlockSpec((TB, Hp), lambda b, t: (b, 0)),               # c_n
            ],
            scratch_shapes=[
                pltpu.VMEM((TB, Hp), jnp.float32),
                pltpu.VMEM((TB, Hp), jnp.float32),
            ],
        ),
        compiler_params=pltpu.CompilerParams(
            # batch tiles independent (2nd TC on v7x); time chunks carry state.
            dimension_semantics=("parallel", "arbitrary")),
    )(lengths_b1, gates_btg, w_hh_t)
    return y, h_n, c_n


# ---------------------------------------------------------------------------
# Kernel 3: MLP head -- Linear -> leaky_relu -> Linear -> log_softmax.
# Grid = (row tiles [parallel], pass in {stats, write}, vocab tiles).
# Pass 0: accumulate running max / sum-exp across vocab tiles in VMEM scratch.
# Pass 1: recompute the vocab-tile logits and write logits - lse.
# h1 = leaky_relu(x @ W1 + b1) is computed once per row tile and kept in VMEM.
# ---------------------------------------------------------------------------
def _head_kernel(x_ref, w1_ref, b1_ref, w2_ref, b2_ref, o_ref,
                 h1_sc, m_sc, s_sc):
    p = pl.program_id(1)
    v = pl.program_id(2)

    @pl.when((p == 0) & (v == 0))
    def _():
        h1 = (jnp.dot(x_ref[...], w1_ref[...],
                      preferred_element_type=jnp.float32) + b1_ref[...])
        h1 = jnp.where(h1 >= 0, h1, 0.01 * h1)        # F.leaky_relu default slope
        h1_sc[...] = h1.astype(jnp.bfloat16)
        m_sc[...] = jnp.full_like(m_sc, -jnp.inf)
        s_sc[...] = jnp.zeros_like(s_sc)

    logits = (jnp.dot(h1_sc[...], w2_ref[...],
                      preferred_element_type=jnp.float32) + b2_ref[...])

    @pl.when(p == 0)
    def _():
        m_prev = m_sc[...]
        m_new = jnp.maximum(m_prev, jnp.max(logits, axis=-1, keepdims=True))
        s_sc[...] = (s_sc[...] * jnp.exp(m_prev - m_new)
                     + jnp.sum(jnp.exp(logits - m_new), axis=-1, keepdims=True))
        m_sc[...] = m_new

    @pl.when(p == 1)
    def _():
        lse = m_sc[...] + jnp.log(s_sc[...])
        o_ref[...] = (logits - lse).astype(o_ref.dtype)


def head_pallas(x_nh, w1_t, b1_row, w2_t, b2_row):
    """x_nh: (N, Hp) bf16. w1_t: (Hp, Lp) bf16, w2_t: (Lp, Vp) bf16.
    Returns (N, Vp) f32 log-probs (padded vocab columns are garbage)."""
    N, Hp = x_nh.shape
    Lp = w1_t.shape[1]
    Vp = w2_t.shape[1]
    TN = 256 if N >= 256 else _round_up(N, 8)   # TODO(synk): 512 on v5e/v6e
    N_pad = _round_up(N, TN)
    TV = 512 if Vp % 512 == 0 else (256 if Vp % 256 == 0 else 128)
    x_p = x_nh.astype(jnp.bfloat16)
    if N_pad != N:
        x_p = jnp.pad(x_p, ((0, N_pad - N), (0, 0)))
    out = pl.pallas_call(
        _head_kernel,
        out_shape=jax.ShapeDtypeStruct((N_pad, Vp), jnp.float32),
        grid_spec=pltpu.PrefetchScalarGridSpec(
            num_scalar_prefetch=0,
            grid=(N_pad // TN, 2, Vp // TV),
            in_specs=[
                pl.BlockSpec((TN, Hp), lambda i, p, v: (i, 0)),
                pl.BlockSpec((Hp, Lp), lambda i, p, v: (0, 0)),   # W1 resident
                pl.BlockSpec((1, Lp), lambda i, p, v: (0, 0)),
                pl.BlockSpec((Lp, TV), lambda i, p, v: (0, v)),   # W2 vocab tile
                pl.BlockSpec((1, TV), lambda i, p, v: (0, v)),
            ],
            out_specs=pl.BlockSpec((TN, TV), lambda i, p, v: (i, v)),
            scratch_shapes=[
                pltpu.VMEM((TN, Lp), jnp.bfloat16),   # h1, computed once / row tile
                pltpu.VMEM((TN, 1), jnp.float32),     # running max
                pltpu.VMEM((TN, 1), jnp.float32),     # running sum-exp
            ],
        ),
        compiler_params=pltpu.CompilerParams(
            dimension_semantics=("parallel", "arbitrary", "arbitrary")),
    )(x_p, w1_t, b1_row, w2_t, b2_row)
    return out[:N] if N_pad != N else out


# ---------------------------------------------------------------------------
# Parameters (PyTorch-style), kernel-friendly prepared params, and the forward.
# ---------------------------------------------------------------------------
def init_params(key, vocab_size, emb_dim, hidden_units, layers_num, linear_size):
    keys = jax.random.split(key, 5 + 4 * layers_num)
    ki = iter(keys)

    def uni(k, shape, scale):
        return jax.random.uniform(k, shape, jnp.float32, -scale, scale)

    emb = jax.random.normal(next(ki), (vocab_size, emb_dim), jnp.float32)
    emb = emb.at[0].set(0.0)  # padding_idx=0

    lstm = []
    s = 1.0 / np.sqrt(hidden_units)
    for layer_idx in range(layers_num):
        in_dim = emb_dim if layer_idx == 0 else hidden_units
        lstm.append(dict(
            w_ih=uni(next(ki), (4 * hidden_units, in_dim), s),
            w_hh=uni(next(ki), (4 * hidden_units, hidden_units), s),
            b_ih=uni(next(ki), (4 * hidden_units,), s),
            b_hh=uni(next(ki), (4 * hidden_units,), s),
        ))

    s1 = 1.0 / np.sqrt(hidden_units)
    s2 = 1.0 / np.sqrt(linear_size)
    return dict(
        emb=emb,
        lstm=lstm,
        w1=uni(next(ki), (linear_size, hidden_units), s1),
        b1=uni(next(ki), (linear_size,), s1),
        w2=uni(next(ki), (vocab_size, linear_size), s2),
        b2=uni(next(ki), (vocab_size,), s2),
    )


def _permute_pad_gate_cols(w_t, H, Hp):
    """Last axis is 4H in PyTorch gate order (i, f, g, o). Returns 4Hp in
    kernel order (i, f, o, g), each gate zero-padded H -> Hp."""
    i_b = w_t[..., 0 * H:1 * H]
    f_b = w_t[..., 1 * H:2 * H]
    g_b = w_t[..., 2 * H:3 * H]
    o_b = w_t[..., 3 * H:4 * H]
    pad = [(0, 0)] * (w_t.ndim - 1) + [(0, Hp - H)]
    return jnp.concatenate([jnp.pad(b, pad) for b in (i_b, f_b, o_b, g_b)],
                           axis=-1)


def prepare_params(params):
    """One-time weight permute / pad / transpose / bf16 cast (off the hot path).
    Padded H / L lanes are zero (they stay exactly zero through the network);
    padded vocab columns get bias -1e30 so they never affect log_softmax."""
    H = params["lstm"][0]["w_hh"].shape[1]
    Hp = _round_up(H, 128)
    L = params["w1"].shape[0]
    V = params["w2"].shape[0]
    Lp = _round_up(L, 128)
    Vp = _round_up(V, 128)

    lstm = []
    for layer_idx, layer in enumerate(params["lstm"]):
        w_ih_t = jnp.transpose(layer["w_ih"])               # (in, 4H)
        w_hh_t = jnp.transpose(layer["w_hh"])               # (H, 4H)
        if layer_idx > 0:                                   # input is padded y
            w_ih_t = jnp.pad(w_ih_t, ((0, Hp - H), (0, 0)))
        w_hh_t = jnp.pad(w_hh_t, ((0, Hp - H), (0, 0)))
        bias = (layer["b_ih"] + layer["b_hh"]).reshape(1, 4 * H)
        lstm.append(dict(
            w_ih_t=_permute_pad_gate_cols(w_ih_t, H, Hp).astype(jnp.bfloat16),
            w_hh_t=_permute_pad_gate_cols(w_hh_t, H, Hp).astype(jnp.bfloat16),
            bias=_permute_pad_gate_cols(bias, H, Hp).astype(jnp.float32),
        ))

    w1_t = jnp.pad(jnp.transpose(params["w1"]), ((0, Hp - H), (0, Lp - L)))
    b1 = jnp.pad(params["b1"].reshape(1, L), ((0, 0), (0, Lp - L)))
    w2_t = jnp.pad(jnp.transpose(params["w2"]), ((0, Lp - L), (0, Vp - V)))
    b2 = jnp.pad(params["b2"].reshape(1, V), ((0, 0), (0, Vp - V)),
                 constant_values=-1e30)
    return dict(
        emb=params["emb"].astype(jnp.float32),
        lstm=lstm,
        w1_t=w1_t.astype(jnp.bfloat16), b1=b1.astype(jnp.float32),
        w2_t=w2_t.astype(jnp.bfloat16), b2=b2.astype(jnp.float32),
        H=H, Hp=Hp, V=V,
    )


def network_forward(kparams, tokens, seq_lengths):
    """tokens: (B, T) int32; seq_lengths: (B,) int32 (sorted descending,
    max == T, as pack_padded_sequence requires).
    Returns (log_probs (B, T, V), (h_n, c_n) each (layers, B, H))."""
    B, T = tokens.shape
    H, Hp, V = kparams["H"], kparams["Hp"], kparams["V"]
    x = kparams["emb"][tokens]                       # (B, T, E) gather (plain XLA)
    lengths_b1 = seq_lengths.astype(jnp.int32).reshape(B, 1)

    TB = _pick_batch_tile(B)
    Tt = _pick_time_chunk(T, TB, Hp)
    T_pad = _round_up(T, Tt)
    if T_pad != T:
        x = jnp.pad(x, ((0, 0), (0, T_pad - T), (0, 0)))

    h_finals, c_finals = [], []
    for layer in kparams["lstm"]:
        in_dim = x.shape[-1]
        # Batched input projection for ALL timesteps: one big MXU matmul,
        # gates stored bf16 (largest intermediate -> halved HBM traffic).
        gates = linear_pallas(x.reshape(B * T_pad, in_dim), layer["w_ih_t"],
                              layer["bias"], out_dtype=jnp.bfloat16)
        gates = gates.reshape(B, T_pad, 4 * Hp)
        x, h_n, c_n = lstm_layer_pallas(gates, lengths_b1, layer["w_hh_t"],
                                        Tt=Tt, TB=TB)
        h_finals.append(h_n[:, :H])
        c_finals.append(c_n[:, :H])
    state = (jnp.stack(h_finals, axis=0), jnp.stack(c_finals, axis=0))

    flat = x[:, :T, :].reshape(B * T, Hp)            # bf16, batch-major
    logp = head_pallas(flat, kparams["w1_t"], kparams["b1"],
                       kparams["w2_t"], kparams["b2"])
    return logp[:, :V].reshape(B, T, V), state


# ---------------------------------------------------------------------------
# Pure-JAX reference (mirrors the PyTorch module semantics) for validation.
# ---------------------------------------------------------------------------
def reference_forward(params, tokens, seq_lengths):
    B, T = tokens.shape
    x = params["emb"][tokens]
    H = params["lstm"][0]["w_hh"].shape[1]
    h_finals, c_finals = [], []
    for layer in params["lstm"]:
        w_ih, w_hh = layer["w_ih"], layer["w_hh"]
        b_ih, b_hh = layer["b_ih"], layer["b_hh"]
        h = jnp.zeros((B, H), jnp.float32)
        c = jnp.zeros((B, H), jnp.float32)
        ys = []
        for t in range(T):
            gates = x[:, t] @ w_ih.T + b_ih + h @ w_hh.T + b_hh
            i_g = jax.nn.sigmoid(gates[:, 0 * H:1 * H])
            f_g = jax.nn.sigmoid(gates[:, 1 * H:2 * H])
            g_g = jnp.tanh(gates[:, 2 * H:3 * H])
            o_g = jax.nn.sigmoid(gates[:, 3 * H:4 * H])
            c_new = f_g * c + i_g * g_g
            h_new = o_g * jnp.tanh(c_new)
            mask = (seq_lengths > t)[:, None]
            h = jnp.where(mask, h_new, h)
            c = jnp.where(mask, c_new, c)
            ys.append(jnp.where(mask, h_new, 0.0))
        x = jnp.stack(ys, axis=1)
        h_finals.append(h)
        c_finals.append(c)
    out = x @ params["w1"].T + params["b1"]
    out = jnp.where(out >= 0, out, 0.01 * out)
    logits = out @ params["w2"].T + params["b2"]
    logp = jax.nn.log_softmax(logits, axis=2)
    return logp, (jnp.stack(h_finals, 0), jnp.stack(c_finals, 0))


if __name__ == "__main__":
    # Small, module-consistent hyper-parameters (dropout_prob=0 -> no dropout).
    VOCAB, EMB, HIDDEN, LAYERS, LINEAR = 40, 16, 32, 2, 64
    B, T = 2, 8

    key = jax.random.PRNGKey(0)
    kp, kt = jax.random.split(key)
    params = init_params(kp, VOCAB, EMB, HIDDEN, LAYERS, LINEAR)
    kparams = prepare_params(params)

    seq_lengths = jnp.array([8, 5], dtype=jnp.int32)   # sorted descending, max == T
    tokens = jax.random.randint(kt, (B, T), 1, VOCAB, dtype=jnp.int32)
    tokens = jnp.where(jnp.arange(T)[None, :] < seq_lengths[:, None], tokens, 0)

    logp, (h_n, c_n) = network_forward(kparams, tokens, seq_lengths)
    jax.block_until_ready((logp, h_n, c_n))

    # Sanity check against the pure-f32 JAX reference (bf16 matmuls + bf16
    # gate/y storage -> loose tolerance).
    ref_logp, (ref_h, ref_c) = reference_forward(params, tokens, seq_lengths)
    np.testing.assert_allclose(np.asarray(logp), np.asarray(ref_logp), atol=5e-2, rtol=5e-2)
    np.testing.assert_allclose(np.asarray(h_n), np.asarray(ref_h), atol=5e-2, rtol=5e-2)
    np.testing.assert_allclose(np.asarray(c_n), np.asarray(ref_c), atol=5e-2, rtol=5e-2)

    print("KERNEL_OK")
</pallas_src>

<mosaic_0001>
module attributes {stable_mosaic.version = 11 : i64} {
  func.func @_linear_bias_kernel(%arg0: i32, %arg1: memref<16x16xbf16, #tpu.memory_space<vmem>>, %arg2: memref<16x512xbf16, #tpu.memory_space<vmem>>, %arg3: memref<1x512xf32, #tpu.memory_space<vmem>>, %arg4: memref<16x512xbf16, #tpu.memory_space<vmem>>) attributes {dimension_semantics = [#tpu.dimension_semantics<parallel>], iteration_bounds = array<i64: 1>, scalar_prefetch = 0 : i64, scratch_operands = 0 : i64, tpu.core_type = #tpu.core_type<tc>, window_params = [{transform_indices = @transform_0, window_bounds = array<i64: 16, 16>}, {pipeline_mode = #tpu.pipeline_mode<synchronous>, transform_indices = @transform_1, window_bounds = array<i64: 16, 512>}, {pipeline_mode = #tpu.pipeline_mode<synchronous>, transform_indices = @transform_2, window_bounds = array<i64: 1, 512>}, {transform_indices = @transform_3, window_bounds = array<i64: 16, 512>}]} {
    %c0 = arith.constant 0 : index
    %c0_0 = arith.constant 0 : index
    %0 = vector.load %arg1[%c0, %c0_0] : memref<16x16xbf16, #tpu.memory_space<vmem>>, vector<16x16xbf16>
    %c0_1 = arith.constant 0 : index
    %c0_2 = arith.constant 0 : index
    %1 = vector.load %arg2[%c0_1, %c0_2] : memref<16x512xbf16, #tpu.memory_space<vmem>>, vector<16x512xbf16>
    %cst = arith.constant dense<0.000000e+00> : vector<16x512xf32>
    %2 = tpu.matmul %0, %1, %cst {dimension_numbers = #tpu.dot_dimension_numbers<[1], [0], [0], [1], [0, 0, 1, 1], [], []>} : vector<16x16xbf16>, vector<16x512xbf16>, vector<16x512xf32> -> vector<16x512xf32>
    %c0_3 = arith.constant 0 : index
    %c0_4 = arith.constant 0 : index
    %3 = vector.load %arg3[%c0_3, %c0_4] : memref<1x512xf32, #tpu.memory_space<vmem>>, vector<1x512xf32>
    %4 = vector.broadcast %3 : vector<1x512xf32> to vector<16x512xf32>
    %5 = arith.addf %2, %4 : vector<16x512xf32>
    %6 = arith.truncf %5 : vector<16x512xf32> to vector<16x512xbf16>
    %c0_5 = arith.constant 0 : index
    %c0_6 = arith.constant 0 : index
    %7 = vector.load %arg4[%c0_5, %c0_6] : memref<16x512xbf16, #tpu.memory_space<vmem>>, vector<16x512xbf16>
    tpu.vector_store %arg4[%c0_5, %c0_6], %6 {strides = array<i32>} : memref<16x512xbf16, #tpu.memory_space<vmem>>, vector<16x512xbf16>,
    return
  }
  func.func @transform_0(%arg0: i32) -> (i32, i32) {
    %c0_i32 = arith.constant 0 : i32
    %c0_i32_0 = arith.constant 0 : i32
    return %arg0, %c0_i32 : i32, i32
  }
  func.func @transform_1(%arg0: i32) -> (i32, i32) {
    %c0_i32 = arith.constant 0 : i32
    %c0_i32_0 = arith.constant 0 : i32
    %c0_i32_1 = arith.constant 0 : i32
    return %c0_i32, %c0_i32_0 : i32, i32
  }
  func.func @transform_2(%arg0: i32) -> (i32, i32) {
    %c0_i32 = arith.constant 0 : i32
    %c0_i32_0 = arith.constant 0 : i32
    %c0_i32_1 = arith.constant 0 : i32
    return %c0_i32, %c0_i32_0 : i32, i32
  }
  func.func @transform_3(%arg0: i32) -> (i32, i32) {
    %c0_i32 = arith.constant 0 : i32
    %c0_i32_0 = arith.constant 0 : i32
    return %arg0, %c0_i32 : i32, i32
  }
}

</mosaic_0001>

<llo_original>
// kernel: tpu_custom_call.1
$region0: #{tpu_custom_call.1}
  #allocation0 [shape = 'u32[]', space=smem, size = 0x4, offset = 0x4, fixed_abs, tag = 'smem constant byte address 0x4 - core index']
  #allocation1 [shape = 'u32[144,128]{1,0:T(1,128)}', space=vmem, size = 0x12000, scoped, tag = 'internal scratch']
  %s0 = inlined_call_operand.hbm [shape: bf16[16,16], index: 0, kind: input, shape index: {}]
  %s1 = inlined_call_operand.hbm [shape: bf16[16,512], index: 1, kind: input, shape index: {}]
  %s2 = inlined_call_operand.vmem [shape: f32[1,512], index: 2, kind: input, shape index: {}]
  %s3 = inlined_call_operand.hbm [shape: bf16[16,512], index: 3, kind: output, shape index: {}]
  %s4 = sld [smem:[#allocation0]]
  $region30: #{tpu_custom_call.1} parent=0
    _
  %s6 = ssub.s32 1, %s4
  %s7 = scalar_select 0, %s6, %s4
  $region1: #{tpu_custom_call.1} parent=0
    #allocation2 [shape = 'u8[4096]{0}', space=vmem, size = 0x1000, scoped, tag = 'input window, operand 0, single buffered']
    #allocation3 [shape = 's32[1]{0}', space=sflag, size = 0x4, scoped, tag = 'scoped memory for tpu_custom_call.1']
    #allocation4 [shape = 's32[1]{0}', space=sflag, size = 0x4, scoped, tag = 'scoped memory for tpu_custom_call.1']
    #allocation5 [shape = 'u8[16384]{0}', space=vmem, size = 0x4000, scoped, tag = 'input window, operand 1, single buffered']
    #allocation6 [shape = 's32[1]{0}', space=sflag, size = 0x4, scoped, tag = 'scoped memory for tpu_custom_call.1']
    #allocation7 [shape = 'u8[16384]{0}', space=vmem, size = 0x4000, scoped, tag = 'output window, operand 0, single buffered']
    %8 = vsyncpa [#allocation3], 0
    %9 = vsyncpa [#allocation6], 0
    %10 = vsyncpa [#allocation4], 0
    // Predicated region
    $region2: #{tpu_custom_call.1} parent=1 // pred_check
      _
    $region3: #{tpu_custom_call.1} parent=1 // pred_check_branch
      %12 = sbr.rel (0) target = $region5
    $region4: #{tpu_custom_call.1} parent=1 // pred_region
      %s14 = ssub.s32 128, 128
      %15 = vsyncadd [#allocation3], %s14
      %s16 = sshll.u32 [#allocation2], 4
      %s17 = int_to_ptr.vmem [resolvable:$true] %s16
      %22 = dma.hbm_to_vmem [thread:$0]  %s0, 128, %s17, [#allocation3], 64, 64, 4
    $region5: #{tpu_custom_call.1} parent=1 // pred_fallthru
      _
    // Predicated region
    $region6: #{tpu_custom_call.1} parent=1 // pred_check
      _
    $region7: #{tpu_custom_call.1} parent=1 // pred_check_branch
      %24 = sbr.rel (0) target = $region9
    $region8: #{tpu_custom_call.1} parent=1 // pred_region
      %s26 = ssub.s32 512, 512
      %27 = vsyncadd [#allocation6], %s26
      %s28 = sshll.u32 [#allocation5], 4
      %s29 = int_to_ptr.vmem [resolvable:$true] %s28
      %34 = dma.hbm_to_vmem [thread:$0]  %s1, 512, %s29, [#allocation6], 256, 256, 16
    $region9: #{tpu_custom_call.1} parent=1 // pred_fallthru
      _
    // Predicated region
    $region10: #{tpu_custom_call.1} parent=1 // pred_check
      _
    $region11: #{tpu_custom_call.1} parent=1 // pred_check_branch
      %36 = sbr.rel (0) target = $region13
    $region12: #{tpu_custom_call.1} parent=1 // pred_region
      _
    $region13: #{tpu_custom_call.1} parent=1 // pred_fallthru
      _
    // Predicated region
    $region14: #{tpu_custom_call.1} parent=1 // pred_check
      _
    $region15: #{tpu_custom_call.1} parent=1 // pred_check_branch
      %38 = sbr.rel (0) target = $region17
    $region16: #{tpu_custom_call.1} parent=1 // pred_region
      %39 = dma.done [#allocation3], 128
    $region17: #{tpu_custom_call.1} parent=1 // pred_fallthru
      _
    // Predicated region
    $region18: #{tpu_custom_call.1} parent=1 // pred_check
      _
    $region19: #{tpu_custom_call.1} parent=1 // pred_check_branch
      %41 = sbr.rel (0) target = $region21
    $region20: #{tpu_custom_call.1} parent=1 // pred_region
      %42 = dma.done [#allocation6], 512
    $region21: #{tpu_custom_call.1} parent=1 // pred_fallthru
      _
    %v44 = vld [vmem:[#allocation2] sm:$0xf]
    %v45 = vld [vmem:[#allocation2 + $0x4] sm:$0xf]
    %v46 = vld [vmem:[#allocation5] sm:$0xff]
    %v47 = vld [vmem:[#allocation5 + $0x8] sm:$0xff]
    %v48 = vld [vmem:[#allocation5 + $0x10] sm:$0xff]
    %v49 = vld [vmem:[#allocation5 + $0x18] sm:$0xff]
    %v50 = vld [vmem:[%s2] sm:$0xf]
    %v52 = vlaneseq
    %v53 = vshrl.u32 %v52, 7
    %v54 = vsub.s32 0, %v53
    %v55 = vrot.slane %v50, %v54
    %v56 = vlaneseq
    %v57 = vshrl.u32 %v56, 7
    %v58 = vsub.s32 1, %v57
    %v59 = vrot.slane %v50, %v58
    %v60 = vlaneseq
    %v61 = vshrl.u32 %v60, 7
    %v62 = vsub.s32 2, %v61
    %v63 = vrot.slane %v50, %v62
    %v64 = vlaneseq
    %v65 = vshrl.u32 %v64, 7
    %v66 = vsub.s32 3, %v65
    %v67 = vrot.slane %v50, %v66
    %v74 = vunpack.c.l.b16 %v44
    %v75 = vunpack.c.l.b16 %v45
    %v76 = vpack.c.b16 %v75, %v74
    %v81 = vunpack.c.l.b16 %v46
    %v82 = vunpack.c.h.b16 %v46
    %v83 = vunpack.c.l.b16 %v47
    %v84 = vunpack.c.h.b16 %v47
    %v85 = vunpack.c.l.b16 %v48
    %v86 = vunpack.c.h.b16 %v48
    %v87 = vunpack.c.l.b16 %v49
    %v88 = vunpack.c.h.b16 %v49
    %v89 = vpack.c.b16 %v85, %v81
    %v90 = vpack.c.b16 %v86, %v82
    %v91 = vpack.c.b16 %v87, %v83
    %v92 = vpack.c.b16 %v88, %v84
    %vm97 = vcmask 130048
    %v99 = vsel %vm97, %v76, 0
    %101 = vmatprep.subr.bf16.mxu0 %v90
    %102 = vmatpush1.bf16.msra.mxu0 %v89
    %103 = vmatprep.subr.bf16.mxu0 0
    %104 = vmatpush1.bf16.msra.mxu0 0
    %105 = vmatprep.subr.bf16.mxu0 0
    %106 = vmatpush1.bf16.msra.mxu0 0
    %107 = vmatprep.subr.bf16.mxu0 0
    %108 = vmatpush1.bf16.msra.mxu0 0
    %109 = vmatprep.subr.bf16.mxu0 0
    %110 = vmatpush1.bf16.msra.mxu0 0
    %111 = vmatprep.subr.bf16.mxu0 0
    %112 = vmatpush1.bf16.msra.mxu0 0
    %113 = vmatprep.subr.bf16.mxu0 0
    %114 = vmatpush1.bf16.msra.mxu0 0
    %115 = vmatprep.subr.bf16.mxu0 0
    %116 = vmatpush1.bf16.msra.mxu0 0
    %117 = vmatprep.subr.bf16.mxu0 0
    %118 = vmatpush1.bf16.msra.mxu0 0
    %119 = vmatprep.subr.bf16.mxu0 0
    %120 = vmatpush1.bf16.msra.mxu0 0
    %121 = vmatprep.subr.bf16.mxu0 0
    %122 = vmatpush1.bf16.msra.mxu0 0
    %123 = vmatprep.subr.bf16.mxu0 0
    %124 = vmatpush1.bf16.msra.mxu0 0
    %125 = vmatprep.subr.bf16.mxu0 0
    %126 = vmatpush1.bf16.msra.mxu0 0
    %127 = vmatprep.subr.bf16.mxu0 0
    %128 = vmatpush1.bf16.msra.mxu0 0
    %129 = vmatprep.subr.bf16.mxu0 0
    %130 = vmatpush1.bf16.msra.mxu0 0
    %131 = vmatprep.subr.bf16.mxu0 0
    %132 = vmatpush1.bf16.msra.mxu0 0
    %133 = vmatprep.mubr.bf16.mxu0 0
    %134 = vmatmul.mubr.bf16.gmra.mrb[0].mxu0 %v99
    %v135 = vpop.f32.mrb[0].mxu0
    %v136 = vadd.f32 %v55, %v135
    %v137 = vpop.f32.mrb[0].mxu0
    %v138 = vadd.f32 %v59, %v137
    %v139 = vpop.f32.mrb[0].mxu0
    %v140 = vadd.f32 %v55, %v139
    %v141 = vpop.f32.mrb[0].mxu0
    %v142 = vadd.f32 %v59, %v141
    %143 = vdwg.mxu0
    %144 = vmatprep.subr.bf16.mxu0 %v92
    %145 = vmatpush1.bf16.msra.mxu0 %v91
    %146 = vmatprep.subr.bf16.mxu0 0
    %147 = vmatpush1.bf16.msra.mxu0 0
    %148 = vmatprep.subr.bf16.mxu0 0
    %149 = vmatpush1.bf16.msra.mxu0 0
    %150 = vmatprep.subr.bf16.mxu0 0
    %151 = vmatpush1.bf16.msra.mxu0 0
    %152 = vmatprep.subr.bf16.mxu0 0
    %153 = vmatpush1.bf16.msra.mxu0 0
    %154 = vmatprep.subr.bf16.mxu0 0
    %155 = vmatpush1.bf16.msra.mxu0 0
    %156 = vmatprep.subr.bf16.mxu0 0
    %157 = vmatpush1.bf16.msra.mxu0 0
    %158 = vmatprep.subr.bf16.mxu0 0
    %159 = vmatpush1.bf16.msra.mxu0 0
    %160 = vmatprep.subr.bf16.mxu0 0
    %161 = vmatpush1.bf16.msra.mxu0 0
    %162 = vmatprep.subr.bf16.mxu0 0
    %163 = vmatpush1.bf16.msra.mxu0 0
    %164 = vmatprep.subr.bf16.mxu0 0
    %165 = vmatpush1.bf16.msra.mxu0 0
    %166 = vmatprep.subr.bf16.mxu0 0
    %167 = vmatpush1.bf16.msra.mxu0 0
    %168 = vmatprep.subr.bf16.mxu0 0
    %169 = vmatpush1.bf16.msra.mxu0 0
    %170 = vmatprep.subr.bf16.mxu0 0
    %171 = vmatpush1.bf16.msra.mxu0 0
    %172 = vmatprep.subr.bf16.mxu0 0
    %173 = vmatpush1.bf16.msra.mxu0 0
    %174 = vmatprep.subr.bf16.mxu0 0
    %175 = vmatpush1.bf16.msra.mxu0 0
    %176 = vmatprep.mubr.bf16.mxu0 0
    %177 = vmatmul.mubr.bf16.gmra.mrb[0].mxu0 %v99
    %v178 = vpop.f32.mrb[0].mxu0
    %v179 = vadd.f32 %v63, %v178
    %v180 = vpop.f32.mrb[0].mxu0
    %v181 = vadd.f32 %v67, %v180
    %v182 = vpop.f32.mrb[0].mxu0
    %v183 = vadd.f32 %v63, %v182
    %v184 = vpop.f32.mrb[0].mxu0
    %v185 = vadd.f32 %v67, %v184
    %186 = vdwg.mxu0
    %v187 = vpack.c.bf16 %v140, %v136
    %v188 = vpack.c.bf16 %v142, %v138
    %v189 = vpack.c.bf16 %v183, %v179
    %v190 = vpack.c.bf16 %v185, %v181
    %v195 = vunpack.c.l.b16 %v187
    %v196 = vunpack.c.l.b16 %v188
    %v197 = vunpack.c.l.b16 %v189
    %v198 = vunpack.c.l.b16 %v190
    %v199 = vunpack.c.h.b16 %v187
    %v200 = vunpack.c.h.b16 %v188
    %v201 = vunpack.c.h.b16 %v189
    %v202 = vunpack.c.h.b16 %v190
    %v203 = vpack.c.b16 %v196, %v195
    %v204 = vpack.c.b16 %v198, %v197
    %v205 = vpack.c.b16 %v200, %v199
    %v206 = vpack.c.b16 %v202, %v201
    %211 = vst [vmem:[#allocation7] sm:$0xff] %v203
    %212 = vst [vmem:[#allocation7 + $0x8] sm:$0xff] %v204
    %213 = vst [vmem:[#allocation7 + $0x10] sm:$0xff] %v205
    %214 = vst [vmem:[#allocation7 + $0x18] sm:$0xff] %v206
    // Predicated region
    $region22: #{tpu_custom_call.1} parent=1 // pred_check
      _
    $region23: #{tpu_custom_call.1} parent=1 // pred_check_branch
      %216 = sbr.rel (0) target = $region25
    $region24: #{tpu_custom_call.1} parent=1 // pred_region
      %s218 = ssub.s32 512, 512
      %219 = vsyncadd [#allocation4], %s218
      %s220 = sshll.u32 [#allocation7], 4
      %s221 = int_to_ptr.vmem [resolvable:$true] %s220
      %226 = dma.vmem_to_hbm [thread:$0]  %s221, 512, %s3, [#allocation4], 256, 256, 16
    $region25: #{tpu_custom_call.1} parent=1 // pred_fallthru
      _
    // Predicated region
    $region26: #{tpu_custom_call.1} parent=1 // pred_check
      _
    $region27: #{tpu_custom_call.1} parent=1 // pred_check_branch
      %228 = sbr.rel (0) target = $region29
    $region28: #{tpu_custom_call.1} parent=1 // pred_region
      %229 = dma.done [#allocation4], 512
    $region29: #{tpu_custom_call.1} parent=1 // pred_fallthru
      _
    %230 = vsyncpa [#allocation3], 1
    %231 = vsyncpa [#allocation6], 1
    %232 = vsyncpa [#allocation4], 1

</llo_original>
